<compile_context>
chip_gen: v6e
topology: v6e:2x2x1
jax: 0.10.0
libtpu: 0.0.40
codegen_flags: <defaults>
</compile_context>

<pallas_src>
import jax
import jax.numpy as jnp
import numpy as np
from jax import lax
from jax.experimental import pallas as pl
from jax.experimental.pallas import tpu as pltpu


def _round_up(x, m):
    return ((x + m - 1) // m) * m


def _span_probs(starts, ends, logits):
    """Fused masked span softmax.

    starts/ends: (TB, N, 1) int32 inclusive span bounds; logits: (TB, 1, S) f32.
    Returns (TB, N, S) f32 probabilities; empty / padded spans give all-zero rows.
    Reproduces the reference exactly, including the quirk that the max is taken over
    mask-zeroed logits and the +1e-13 renormalization.
    """
    tb, n, _ = starts.shape
    s = logits.shape[-1]
    jj = lax.broadcasted_iota(jnp.int32, (tb, n, s), 2)
    maskf = ((jj >= starts) & (jj <= ends)).astype(jnp.float32)        # (TB, N, S)
    masked_logits = logits.astype(jnp.float32) * maskf
    m = jnp.max(masked_logits, axis=-1, keepdims=True)
    e = jnp.exp(masked_logits - m) * maskf
    denom = jnp.sum(e, axis=-1, keepdims=True) + 1e-13                 # (TB, N, 1)
    inv = pl.reciprocal(denom, approx=True)                            # EUP slot
    inv = inv * (2.0 - denom * inv)        # one Newton step on the tiny tensor
    return e * inv


def _span_attention_kernel_cached(starts_ref, ends_ref, logits_ref, seq_ref,
                                  out_ref, p_ref):
    """grid = (batch blocks, D tiles).  D-tile axis is 'arbitrary' and innermost, so the
    probability scratch computed at d == 0 stays valid for the whole batch block."""
    @pl.when(pl.program_id(1) == 0)
    def _():
        p_ref[...] = _span_probs(starts_ref[...], ends_ref[...],
                                 logits_ref[...]).astype(p_ref.dtype)

    # Weighted sum over the current D tile: (TB,N,S) @ (TB,S,tD) -> (TB,N,tD) on MXU.
    # TODO(synk): for production N <= ~16 a VPU broadcast-multiply + chunked lane reduce
    # could beat the M-starved MXU once bf16 halves the memory time (v6e/v7x).
    out_ref[...] = jnp.einsum(
        "bns,bsd->bnd", p_ref[...], seq_ref[...],
        preferred_element_type=jnp.float32).astype(out_ref.dtype)


def _span_attention_kernel_nocache(starts_ref, ends_ref, logits_ref, seq_ref, out_ref):
    """Megacore fallback (small batch): both grid axes 'parallel', so probabilities are
    recomputed per step (cheap VPU/EUP work relative to the DMA-bound matmul)."""
    p = _span_probs(starts_ref[...], ends_ref[...],
                    logits_ref[...]).astype(seq_ref.dtype)
    out_ref[...] = jnp.einsum(
        "bns,bsd->bnd", p, seq_ref[...],
        preferred_element_type=jnp.float32).astype(out_ref.dtype)


def _vmem_capacity_bytes():
    """Per-core VMEM capacity; conservative (v7x) fallback if the query is unavailable."""
    try:
        cap = getattr(pltpu.get_tpu_info(), "vmem_capacity_bytes", None)
        if cap:
            return int(cap)
    except Exception:
        pass
    return 64 * 1024 * 1024


@jax.jit
def self_attentive_span_extractor(sequence_tensor, span_indices, weight, bias,
                                  span_indices_mask=None):
    """JAX/Pallas equivalent of the span-extractor forward built on TimeDistributed."""
    # Carry the sequence tensor in its native dtype: bf16 stays bf16 through the kernel
    # (half the HBM traffic on this bandwidth-bound op); anything exotic is upcast to f32.
    if sequence_tensor.dtype in (jnp.bfloat16, jnp.float32):
        seq = sequence_tensor
    else:
        seq = sequence_tensor.astype(jnp.float32)
    B, S, D = seq.shape
    N = span_indices.shape[1]

    # --- TimeDistributed(Linear(D, 1)): flatten (B,S,D)->(B*S,D), Linear, unflatten.
    #     Hoisted out of the kernel as one XLA GEMV over the UNPADDED sequence, with f32
    #     accumulation regardless of the carry dtype. ---
    w_vec = weight.reshape(-1).astype(jnp.float32)
    b_val = bias.reshape(()).astype(jnp.float32)
    logits = jnp.einsum("bsd,d->bs", seq, w_vec,
                        preferred_element_type=jnp.float32) + b_val        # (B, S) f32

    # --- batch block: TB elements per grid step; keep >=2 batch blocks when possible so
    #     the "parallel" batch axis can shard across v7x's two TensorCores. ---
    TB = 1
    for cand in (8, 4, 2):
        if B % cand == 0 and B // cand >= 2:
            TB = cand
            break

    S_pad = _round_up(S, 128)
    N_pad = _round_up(N, 8)

    # --- generation-aware VMEM budget (v5e/v6e: 128 MiB physical, v7x: 64 MiB). ---
    vmem_cap = _vmem_capacity_bytes()
    vmem_limit = min(int(vmem_cap * 3 // 4), 112 * 1024 * 1024)
    budget = int(vmem_limit * 0.6)

    item = jnp.dtype(seq.dtype).itemsize

    def _vmem_need(tile_d):
        seq_blk = 2 * TB * S_pad * tile_d * item        # double-buffered seq blocks
        out_blk = 2 * TB * N_pad * tile_d * item        # double-buffered out blocks
        p_blk = TB * N_pad * S_pad * item               # probability scratch / value
        tmp = 3 * TB * N_pad * S_pad * 4                # f32 softmax temporaries
        fixed = 4 * TB * (2 * N_pad + S_pad) * 4        # starts / ends / logits blocks
        return seq_blk + out_blk + p_blk + tmp + fixed

    # Largest 128-multiple hidden-dim tile that fits the budget (no divisor constraint:
    # D is padded up to a multiple of tD afterwards, cdiv-style).
    D_ceil = _round_up(D, 128)
    tD = 128
    for cand in range(256, min(D_ceil, 2048) + 1, 128):
        if _vmem_need(cand) <= budget:
            tD = cand
    D_pad = _round_up(D, tD)

    # --- padding: skipped for seq when S and D are already aligned (common transformer
    #     case) to avoid an extra HBM read+write of the big tensor. ---
    pad_s, pad_d, pad_n = S_pad - S, D_pad - D, N_pad - N
    seq_p = jnp.pad(seq, ((0, 0), (0, pad_s), (0, pad_d))) if (pad_s or pad_d) else seq
    logits_p = jnp.pad(logits, ((0, 0), (0, pad_s)))[:, None, :]            # (B,1,S_pad)

    starts = span_indices[..., 0].astype(jnp.int32)
    ends = span_indices[..., 1].astype(jnp.int32)
    # Padded spans are empty (start=0 > end=-1) -> zero mask -> zero output rows.
    starts_p = jnp.pad(starts, ((0, 0), (0, pad_n)))[..., None]             # (B,N_pad,1)
    ends_p = jnp.pad(ends, ((0, 0), (0, pad_n)), constant_values=-1)[..., None]

    n_batch_blocks = B // TB
    grid = (n_batch_blocks, D_pad // tD)

    in_specs = [
        pl.BlockSpec((TB, N_pad, 1), lambda b, d: (b, 0, 0)),     # starts
        pl.BlockSpec((TB, N_pad, 1), lambda b, d: (b, 0, 0)),     # ends
        pl.BlockSpec((TB, 1, S_pad), lambda b, d: (b, 0, 0)),     # logits
        pl.BlockSpec((TB, S_pad, tD), lambda b, d: (b, 0, d)),    # sequence
    ]
    out_spec = pl.BlockSpec((TB, N_pad, tD), lambda b, d: (b, 0, d))
    out_shape = jax.ShapeDtypeStruct((B, N_pad, D_pad), seq.dtype)

    if n_batch_blocks >= 2:
        # Main path: probabilities cached in VMEM across the 'arbitrary' D-tile axis.
        kernel = _span_attention_kernel_cached
        scratch = [pltpu.VMEM((TB, N_pad, S_pad), seq.dtype)]
        semantics = ("parallel", "arbitrary")
    else:
        # Megacore fallback for small batch: every (b, d) step is independent, so both
        # axes can be 'parallel' (v7x splits the D-tile axis across its two cores).
        kernel = _span_attention_kernel_nocache
        scratch = []
        semantics = ("parallel", "parallel")

    out_p = pl.pallas_call(
        kernel,
        out_shape=out_shape,
        grid_spec=pltpu.PrefetchScalarGridSpec(
            num_scalar_prefetch=0,
            grid=grid,
            in_specs=in_specs,
            out_specs=out_spec,
            scratch_shapes=scratch),
        compiler_params=pltpu.CompilerParams(
            dimension_semantics=semantics,
            vmem_limit_bytes=vmem_limit),
    )(starts_p, ends_p, logits_p, seq_p)

    out = out_p[:, :N, :D] if (pad_n or pad_d) else out_p
    if span_indices_mask is not None:
        out = out * span_indices_mask[..., None].astype(out.dtype)
    return out


def _reference_forward(sequence_tensor, span_indices, weight, bias, span_indices_mask=None):
    """Pure-JAX transcription of the PyTorch module (gather-based), for checking."""
    seq = sequence_tensor.astype(jnp.float32)
    logits = seq @ weight.reshape(-1, 1).astype(jnp.float32) + bias.astype(jnp.float32)
    concat = jnp.concatenate([seq, logits], axis=-1)                    # (B, S, D+1)

    starts = span_indices[..., 0]
    ends = span_indices[..., 1]
    widths = ends - starts
    max_w = int(np.max(np.asarray(widths))) + 1                         # data-dependent width
    r = jnp.arange(max_w).reshape(1, 1, max_w)
    span_mask = (r <= widths[..., None]) & ((ends[..., None] - r) >= 0)  # (B, N, W)
    idx = jnp.maximum(ends[..., None] - r, 0)                            # (B, N, W)

    gathered = jnp.take_along_axis(concat[:, None, :, :], idx[..., None], axis=2)
    span_emb = gathered[..., :-1]
    att_logits = gathered[..., -1]

    maskf = span_mask.astype(jnp.float32)
    p = jax.nn.softmax(att_logits * maskf, axis=-1)
    p = p * maskf
    p = p / (jnp.sum(p, axis=-1, keepdims=True) + 1e-13)
    out = jnp.einsum("bnw,bnwd->bnd", p, span_emb)
    if span_indices_mask is not None:
        out = out * span_indices_mask[..., None].astype(out.dtype)
    return out


if __name__ == "__main__":
    B, S, D, N = 2, 16, 32, 8

    key = jax.random.PRNGKey(0)
    k_seq, k_w, k_b, k_start, k_width, k_mask = jax.random.split(key, 6)

    sequence_tensor = jax.random.normal(k_seq, (B, S, D), dtype=jnp.float32)

    # Deterministic Linear(input_dim, 1) parameters (torch-style uniform init).
    bound = 1.0 / np.sqrt(D)
    weight = jax.random.uniform(k_w, (1, D), minval=-bound, maxval=bound, dtype=jnp.float32)
    bias = jax.random.uniform(k_b, (1,), minval=-bound, maxval=bound, dtype=jnp.float32)

    # Valid inclusive spans inside [0, S).
    starts = jax.random.randint(k_start, (B, N), 0, S)
    widths = jax.random.randint(k_width, (B, N), 0, 5)
    ends = jnp.minimum(starts + widths, S - 1)
    span_indices = jnp.stack([starts, ends], axis=-1).astype(jnp.int32)   # (B, N, 2)

    span_indices_mask = (jax.random.uniform(k_mask, (B, N)) > 0.2)

    # --- f32 path (>= 2 batch blocks -> cached-probability kernel) ---
    out = self_attentive_span_extractor(sequence_tensor, span_indices, weight, bias,
                                        span_indices_mask)
    out = jax.block_until_ready(out)
    ref = _reference_forward(sequence_tensor, span_indices, weight, bias, span_indices_mask)
    np.testing.assert_allclose(np.asarray(out), np.asarray(ref), rtol=1e-4, atol=1e-4)

    # --- B == 1 exercises the megacore no-cache fallback path ---
    out1 = self_attentive_span_extractor(sequence_tensor[:1], span_indices[:1],
                                         weight, bias, span_indices_mask[:1])
    out1 = jax.block_until_ready(out1)
    ref1 = _reference_forward(sequence_tensor[:1], span_indices[:1], weight, bias,
                              span_indices_mask[:1])
    np.testing.assert_allclose(np.asarray(out1), np.asarray(ref1), rtol=1e-4, atol=1e-4)

    # --- bf16 carry path (native-dtype kernel blocks; f32 accumulation inside) ---
    out_bf16 = self_attentive_span_extractor(sequence_tensor.astype(jnp.bfloat16),
                                             span_indices, weight, bias, span_indices_mask)
    out_bf16 = jax.block_until_ready(out_bf16)
    np.testing.assert_allclose(np.asarray(out_bf16.astype(jnp.float32)), np.asarray(ref),
                               rtol=5e-2, atol=5e-2)

    print("KERNEL_OK")
</pallas_src>

<mosaic_0001>
module attributes {stable_mosaic.version = 11 : i64} {
  func.func @_span_attention_kernel_cached(%arg0: i32, %arg1: i32, %arg2: memref<1x8x1xi32, #tpu.memory_space<vmem>>, %arg3: memref<1x8x1xi32, #tpu.memory_space<vmem>>, %arg4: memref<1x1x128xf32, #tpu.memory_space<vmem>>, %arg5: memref<1x128x128xf32, #tpu.memory_space<vmem>>, %arg6: memref<1x8x128xf32, #tpu.memory_space<vmem>>, %arg7: memref<1x8x128xf32, #tpu.memory_space<vmem>>) attributes {dimension_semantics = [#tpu.dimension_semantics<parallel>, #tpu.dimension_semantics<arbitrary>], iteration_bounds = array<i64: 2, 1>, scalar_prefetch = 0 : i64, scratch_operands = 1 : i64, tpu.core_type = #tpu.core_type<tc>, window_params = [{transform_indices = @transform_0, window_bounds = array<i64: 1, 8, 1>}, {transform_indices = @transform_1, window_bounds = array<i64: 1, 8, 1>}, {transform_indices = @transform_2, window_bounds = array<i64: 1, 1, 128>}, {transform_indices = @transform_3, window_bounds = array<i64: 1, 128, 128>}, {transform_indices = @transform_4, window_bounds = array<i64: 1, 8, 128>}]} {
    %c0_i32 = arith.constant 0 : i32
    %0 = arith.cmpi eq, %arg1, %c0_i32 : i32
    %1 = arith.extui %0 : i1 to i32
    %c0_i32_0 = arith.constant 0 : i32
    %2 = arith.cmpi ne, %1, %c0_i32_0 : i32
    scf.if %2 {
      %c0_9 = arith.constant 0 : index
      %c0_10 = arith.constant 0 : index
      %c0_11 = arith.constant 0 : index
      %7 = vector.load %arg2[%c0_9, %c0_10, %c0_11] : memref<1x8x1xi32, #tpu.memory_space<vmem>>, vector<1x8x1xi32>
      %c0_12 = arith.constant 0 : index
      %c0_13 = arith.constant 0 : index
      %c0_14 = arith.constant 0 : index
      %8 = vector.load %arg3[%c0_12, %c0_13, %c0_14] : memref<1x8x1xi32, #tpu.memory_space<vmem>>, vector<1x8x1xi32>
      %c0_15 = arith.constant 0 : index
      %c0_16 = arith.constant 0 : index
      %c0_17 = arith.constant 0 : index
      %9 = vector.load %arg4[%c0_15, %c0_16, %c0_17] : memref<1x1x128xf32, #tpu.memory_space<vmem>>, vector<1x1x128xf32>
      %10 = tpu.iota {dimensions = array<i32: 2>} : vector<1x8x128xi32>
      %11 = vector.broadcast %7 : vector<1x8x1xi32> to vector<1x8x128xi32>
      %12 = arith.cmpi sge, %10, %11 : vector<1x8x128xi32>
      %13 = vector.broadcast %8 : vector<1x8x1xi32> to vector<1x8x128xi32>
      %14 = arith.cmpi sle, %10, %13 : vector<1x8x128xi32>
      %15 = arith.andi %12, %14 : vector<1x8x128xi1>
      %16 = arith.extui %15 : vector<1x8x128xi1> to vector<1x8x128xi32>
      %17 = arith.sitofp %16 : vector<1x8x128xi32> to vector<1x8x128xf32>
      %18 = vector.broadcast %9 : vector<1x1x128xf32> to vector<1x8x128xf32>
      %19 = arith.mulf %18, %17 : vector<1x8x128xf32>
      %cst_18 = arith.constant dense<0xFF800000> : vector<1x8xf32>
      %20 = vector.multi_reduction <maximumf>, %19, %cst_18 [2] : vector<1x8x128xf32> to vector<1x8xf32>
      %21 = vector.shape_cast %20 : vector<1x8xf32> to vector<1x8x1xf32>
      %22 = vector.broadcast %21 : vector<1x8x1xf32> to vector<1x8x128xf32>
      %23 = arith.subf %19, %22 : vector<1x8x128xf32>
      %24 = math.exp %23 : vector<1x8x128xf32>
      %25 = arith.mulf %24, %17 : vector<1x8x128xf32>
      %cst_19 = arith.constant dense<0.000000e+00> : vector<1x8xf32>
      %26 = vector.multi_reduction <add>, %25, %cst_19 [2] : vector<1x8x128xf32> to vector<1x8xf32>
      %27 = vector.shape_cast %26 : vector<1x8xf32> to vector<1x8x1xf32>
      %cst_20 = arith.constant 9.99999982E-14 : f32
      %28 = vector.broadcast %cst_20 : f32 to vector<1x8x1xf32>
      %29 = arith.addf %27, %28 : vector<1x8x1xf32>
      %30 = tpu.reciprocal %29 {approx = true} : vector<1x8x1xf32> -> vector<1x8x1xf32>
      %31 = arith.mulf %29, %30 : vector<1x8x1xf32>
      %cst_21 = arith.constant 2.000000e+00 : f32
      %32 = vector.broadcast %cst_21 : f32 to vector<1x8x1xf32>
      %33 = arith.subf %32, %31 : vector<1x8x1xf32>
      %34 = arith.mulf %30, %33 : vector<1x8x1xf32>
      %35 = vector.broadcast %34 : vector<1x8x1xf32> to vector<1x8x128xf32>
      %36 = arith.mulf %25, %35 : vector<1x8x128xf32>
      %c0_22 = arith.constant 0 : index
      %c0_23 = arith.constant 0 : index
      %c0_24 = arith.constant 0 : index
      %37 = vector.load %arg7[%c0_22, %c0_23, %c0_24] : memref<1x8x128xf32, #tpu.memory_space<vmem>>, vector<1x8x128xf32>
      tpu.vector_store %arg7[%c0_22, %c0_23, %c0_24], %36 {strides = array<i32>} : memref<1x8x128xf32, #tpu.memory_space<vmem>>, vector<1x8x128xf32>,
    } else {
    }
    %c0 = arith.constant 0 : index
    %c0_1 = arith.constant 0 : index
    %c0_2 = arith.constant 0 : index
    %3 = vector.load %arg7[%c0, %c0_1, %c0_2] : memref<1x8x128xf32, #tpu.memory_space<vmem>>, vector<1x8x128xf32>
    %c0_3 = arith.constant 0 : index
    %c0_4 = arith.constant 0 : index
    %c0_5 = arith.constant 0 : index
    %4 = vector.load %arg5[%c0_3, %c0_4, %c0_5] : memref<1x128x128xf32, #tpu.memory_space<vmem>>, vector<1x128x128xf32>
    "tpu.trace_start"() <{level = 10 : i32, message = "bns,bsd->bnd"}> : () -> ()
    %cst = arith.constant dense<0.000000e+00> : vector<1x8x128xf32>
    %5 = tpu.matmul %3, %4, %cst {dimension_numbers = #tpu.dot_dimension_numbers<[2], [1], [1], [2], [0, 0, 0, 1, 1, 2], [0], [0]>} : vector<1x8x128xf32>, vector<1x128x128xf32>, vector<1x8x128xf32> -> vector<1x8x128xf32>
    "tpu.trace_stop"() : () -> ()
    %c0_6 = arith.constant 0 : index
    %c0_7 = arith.constant 0 : index
    %c0_8 = arith.constant 0 : index
    %6 = vector.load %arg6[%c0_6, %c0_7, %c0_8] : memref<1x8x128xf32, #tpu.memory_space<vmem>>, vector<1x8x128xf32>
    tpu.vector_store %arg6[%c0_6, %c0_7, %c0_8], %5 {strides = array<i32>} : memref<1x8x128xf32, #tpu.memory_space<vmem>>, vector<1x8x128xf32>,
    return
  }
  func.func @transform_0(%arg0: i32, %arg1: i32) -> (i32, i32, i32) {
    %c0_i32 = arith.constant 0 : i32
    %c0_i32_0 = arith.constant 0 : i32
    %c0_i32_1 = arith.constant 0 : i32
    return %arg0, %c0_i32, %c0_i32_0 : i32, i32, i32
  }
  func.func @transform_1(%arg0: i32, %arg1: i32) -> (i32, i32, i32) {
    %c0_i32 = arith.constant 0 : i32
    %c0_i32_0 = arith.constant 0 : i32
    %c0_i32_1 = arith.constant 0 : i32
    return %arg0, %c0_i32, %c0_i32_0 : i32, i32, i32
  }
  func.func @transform_2(%arg0: i32, %arg1: i32) -> (i32, i32, i32) {
    %c0_i32 = arith.constant 0 : i32
    %c0_i32_0 = arith.constant 0 : i32
    %c0_i32_1 = arith.constant 0 : i32
    return %arg0, %c0_i32, %c0_i32_0 : i32, i32, i32
  }
  func.func @transform_3(%arg0: i32, %arg1: i32) -> (i32, i32, i32) {
    %c0_i32 = arith.constant 0 : i32
    %c0_i32_0 = arith.constant 0 : i32
    return %arg0, %c0_i32, %arg1 : i32, i32, i32
  }
  func.func @transform_4(%arg0: i32, %arg1: i32) -> (i32, i32, i32) {
    %c0_i32 = arith.constant 0 : i32
    %c0_i32_0 = arith.constant 0 : i32
    return %arg0, %c0_i32, %arg1 : i32, i32, i32
  }
}

</mosaic_0001>

<llo_original>
// kernel: self_attentive_span_extractor.1
$region0: #{self_attentive_span_extractor.1}
  #allocation0 [shape = 'u32[]', space=smem, size = 0x4, offset = 0x4, fixed_abs, tag = 'smem constant byte address 0x4 - core index']
  #allocation1 [shape = 'u32[144,128]{1,0:T(1,128)}', space=vmem, size = 0x12000, scoped, tag = 'internal scratch']
  #allocation2 [shape = 'f32[1,8,128]{2,1,0:T(8,128)}', space=vmem, size = 0x1000, scoped, tag = 'scratch operand']
  %s0 = inlined_call_operand.vmem [shape: s32[2,8,1], index: 0, kind: input, shape index: {}]
  %s1 = inlined_call_operand.vmem [shape: s32[2,8,1], index: 1, kind: input, shape index: {}]
  %s2 = inlined_call_operand.vmem [shape: f32[2,1,128], index: 2, kind: input, shape index: {}]
  %s3 = inlined_call_operand.vmem [shape: f32[2,128,128], index: 3, kind: input, shape index: {}]
  %s4 = inlined_call_operand.vmem [shape: f32[2,8,128], index: 4, kind: output, shape index: {}]
  %s5 = sld [smem:[#allocation0]]
  $region53: #{self_attentive_span_extractor.1} parent=0
    _
  %s7 = ssub.s32 1, %s5
  %s8 = scalar_select 0, %s7, %s5
  loop: start=0, step=1, limit=4
  $region2: #{self_attentive_span_extractor.1} parent=0 // loop_pre_header
    _
  $region3: #{self_attentive_span_extractor.1} parent=0 // loop_header
    %s10 = sphi 0, %s14
    %p11 = scmp.ge.s32.totalorder %s10, 4
    %s17 = sphi 0, %s29
    %s18 = sphi 0, %s25
    %s19 = sphi 0, %s17
    %s20 = sphi 0, %s18
    %s21 = sphi 0, %s19
    %s22 = sphi 0, %s20
    %s32 = sphi 0, %s34
    %s35 = sphi 0, %s32
    %s36 = sphi 0, %s35
    %s52 = sphi 0, %s36
    %s58 = sphi 0, %s60
    %s61 = sphi 0, %s58
    %s62 = sphi 0, %s61
    %s78 = sphi 0, %s62
    %s84 = sphi 0, %s86
    %s87 = sphi 0, %s84
    %s88 = sphi 0, %s87
    %s104 = sphi 0, %s88
    %s112 = sphi 0, %s114
    %s115 = sphi 0, %s112
    %s116 = sphi 0, %s115
    %s132 = sphi 0, %s116
    %s140 = sphi 0, %s142
    %s143 = sphi 0, %s140
    %s144 = sphi 0, %s143
    %s160 = sphi 0, %s144
  $region4: #{self_attentive_span_extractor.1} parent=0 // loop_header_branch
    %13 = sbr.rel (%p11) target = $region8
  $region5: #{self_attentive_span_extractor.1} parent=0 // loop_body
    %s15 = ssub.s32 %s10, 1
    %s16 = ssub.s32 %s10, 2
    %s23 = sadd.s32 1, %s18
    %p24 = scmp.ge.s32.totalorder %s23, 1
    %s25 = scalar_select %p24, 0, %s23
    %s26 = sadd.s32 1, %s17
    %s27 = scalar_select %p24, %s26, %s17
    %p28 = scmp.ge.s32.totalorder %s27, 2
    %s29 = scalar_select %p28, 0, %s27
    %s30 = ssub.s32 %s17, %s29
    %p31 = scmp.eq.s32.totalorder %s30, 0
    %s33 = sadd.s32 %s32, 1
    %s34 = scalar_select %p31, %s32, %s33
    %p37 = pneg %p31
    %p38 = scmp.eq.s32.totalorder %s10, 1
    %p39 = por %p37, %p38
    %p40 = scmp.ne.s32.totalorder %s32, %s35
    %p41 = scmp.eq.s32.totalorder %s10, 0
    %p42 = por %p40, %p41
    %p43 = scmp.ne.s32.totalorder %s32, %s35
    %p44 = scmp.eq.s32.totalorder %s15, 1
    %p45 = por %p43, %p44
    %p46 = scmp.ne.s32.totalorder %s35, %s36
    %p47 = scmp.eq.s32.totalorder %s15, 0
    %p48 = por %p46, %p47
    %p49 = scmp.ne.s32.totalorder %s35, %s36
    %p50 = scmp.eq.s32.totalorder %s16, 1
    %p51 = por %p49, %p50
    %p53 = scmp.ne.s32.totalorder %s36, %s52
    %p54 = scmp.eq.s32.totalorder %s16, 0
    %p55 = por %p53, %p54
    %s56 = ssub.s32 %s17, %s29
    %p57 = scmp.eq.s32.totalorder %s56, 0
    %s59 = sadd.s32 %s58, 1
    %s60 = scalar_select %p57, %s58, %s59
    %p63 = pneg %p57
    %p64 = scmp.eq.s32.totalorder %s10, 1
    %p65 = por %p63, %p64
    %p66 = scmp.ne.s32.totalorder %s58, %s61
    %p67 = scmp.eq.s32.totalorder %s10, 0
    %p68 = por %p66, %p67
    %p69 = scmp.ne.s32.totalorder %s58, %s61
    %p70 = scmp.eq.s32.totalorder %s15, 1
    %p71 = por %p69, %p70
    %p72 = scmp.ne.s32.totalorder %s61, %s62
    %p73 = scmp.eq.s32.totalorder %s15, 0
    %p74 = por %p72, %p73
    %p75 = scmp.ne.s32.totalorder %s61, %s62
    %p76 = scmp.eq.s32.totalorder %s16, 1
    %p77 = por %p75, %p76
    %p79 = scmp.ne.s32.totalorder %s62, %s78
    %p80 = scmp.eq.s32.totalorder %s16, 0
    %p81 = por %p79, %p80
    %s82 = ssub.s32 %s17, %s29
    %p83 = scmp.eq.s32.totalorder %s82, 0
    %s85 = sadd.s32 %s84, 1
    %s86 = scalar_select %p83, %s84, %s85
    %p89 = pneg %p83
    %p90 = scmp.eq.s32.totalorder %s10, 1
    %p91 = por %p89, %p90
    %p92 = scmp.ne.s32.totalorder %s84, %s87
    %p93 = scmp.eq.s32.totalorder %s10, 0
    %p94 = por %p92, %p93
    %p95 = scmp.ne.s32.totalorder %s84, %s87
    %p96 = scmp.eq.s32.totalorder %s15, 1
    %p97 = por %p95, %p96
    %p98 = scmp.ne.s32.totalorder %s87, %s88
    %p99 = scmp.eq.s32.totalorder %s15, 0
    %p100 = por %p98, %p99
    %p101 = scmp.ne.s32.totalorder %s87, %s88
    %p102 = scmp.eq.s32.totalorder %s16, 1
    %p103 = por %p101, %p102
    %p105 = scmp.ne.s32.totalorder %s88, %s104
    %p106 = scmp.eq.s32.totalorder %s16, 0
    %p107 = por %p105, %p106
    %s108 = ssub.s32 %s17, %s29
    %s109 = ssub.s32 %s18, %s25
    %s110 = sor.u32 %s108, %s109
    %p111 = scmp.eq.s32.totalorder %s110, 0
    %s113 = sadd.s32 %s112, 1
    %s114 = scalar_select %p111, %s112, %s113
    %p117 = pneg %p111
    %p118 = scmp.eq.s32.totalorder %s10, 1
    %p119 = por %p117, %p118
    %p120 = scmp.ne.s32.totalorder %s112, %s115
    %p121 = scmp.eq.s32.totalorder %s10, 0
    %p122 = por %p120, %p121
    %p123 = scmp.ne.s32.totalorder %s112, %s115
    %p124 = scmp.eq.s32.totalorder %s15, 1
    %p125 = por %p123, %p124
    %p126 = scmp.ne.s32.totalorder %s115, %s116
    %p127 = scmp.eq.s32.totalorder %s15, 0
    %p128 = por %p126, %p127
    %p129 = scmp.ne.s32.totalorder %s115, %s116
    %p130 = scmp.eq.s32.totalorder %s16, 1
    %p131 = por %p129, %p130
    %p133 = scmp.ne.s32.totalorder %s116, %s132
    %p134 = scmp.eq.s32.totalorder %s16, 0
    %p135 = por %p133, %p134
    %s136 = ssub.s32 %s17, %s29
    %s137 = ssub.s32 %s18, %s25
    %s138 = sor.u32 %s136, %s137
    %p139 = scmp.eq.s32.totalorder %s138, 0
    %s141 = sadd.s32 %s140, 1
    %s142 = scalar_select %p139, %s140, %s141
    %p145 = pneg %p139
    %p146 = scmp.eq.s32.totalorder %s10, 1
    %p147 = por %p145, %p146
    %p148 = scmp.ne.s32.totalorder %s140, %s143
    %p149 = scmp.eq.s32.totalorder %s10, 0
    %p150 = por %p148, %p149
    %p151 = scmp.ne.s32.totalorder %s140, %s143
    %p152 = scmp.eq.s32.totalorder %s15, 1
    %p153 = por %p151, %p152
    %p154 = scmp.ne.s32.totalorder %s143, %s144
    %p155 = scmp.eq.s32.totalorder %s15, 0
    %p156 = por %p154, %p155
    %p157 = scmp.ne.s32.totalorder %s143, %s144
    %p158 = scmp.eq.s32.totalorder %s16, 1
    %p159 = por %p157, %p158
    %p161 = scmp.ne.s32.totalorder %s144, %s160
    %p162 = scmp.eq.s32.totalorder %s16, 0
    %p163 = por %p161, %p162
    %p164 = scmp.le.s32.totalorder 1, %s10
    %p165 = scmp.lt.s32.totalorder %s10, 3
    %p166 = pnand %p164, %p165
    %p167 = pneg %p166
    // Predicated region
    $region9: #{self_attentive_span_extractor.1} parent=5 // pred_check
      _
    $region10: #{self_attentive_span_extractor.1} parent=5 // pred_check_branch
      %169 = sbr.rel (%p166) target = $region12
    $region11: #{self_attentive_span_extractor.1} parent=5 // pred_region
      %s170 = ssub.s32 %s10, 1
    $region12: #{self_attentive_span_extractor.1} parent=5 // pred_fallthru
      _
    %p171 = scmp.lt.s32.totalorder %s10, 2
    // Predicated region
    $region13: #{self_attentive_span_extractor.1} parent=5 // pred_check
      %p172 = pneg %p171
    $region14: #{self_attentive_span_extractor.1} parent=5 // pred_check_branch
      %174 = sbr.rel (%p172) target = $region16
    $region15: #{self_attentive_span_extractor.1} parent=5 // pred_region
      // Predicated region
      $region17: #{self_attentive_span_extractor.1} parent=15 // pred_check
        %p175 = pneg %p42
      $region18: #{self_attentive_span_extractor.1} parent=15 // pred_check_branch
        %177 = sbr.rel (%p175) target = $region20
      $region19: #{self_attentive_span_extractor.1} parent=15 // pred_region
        %p178 = scmp.lt.s32.totalorder %s17, 1
        %s179 = scalar_select %p178, %s17, 1
        %s180 = smul.addr %s179, 8
        %s181 = scalar_lea.vmem %s0, %s180
      $region20: #{self_attentive_span_extractor.1} parent=15 // pred_fallthru
        _
      // Predicated region
      $region21: #{self_attentive_span_extractor.1} parent=15 // pred_check
        %p182 = pneg %p68
      $region22: #{self_attentive_span_extractor.1} parent=15 // pred_check_branch
        %184 = sbr.rel (%p182) target = $region24
      $region23: #{self_attentive_span_extractor.1} parent=15 // pred_region
        %p185 = scmp.lt.s32.totalorder %s17, 1
        %s186 = scalar_select %p185, %s17, 1
        %s187 = smul.addr %s186, 8
        %s188 = scalar_lea.vmem %s1, %s187
      $region24: #{self_attentive_span_extractor.1} parent=15 // pred_fallthru
        _
      // Predicated region
      $region25: #{self_attentive_span_extractor.1} parent=15 // pred_check
        %p189 = pneg %p94
      $region26: #{self_attentive_span_extractor.1} parent=15 // pred_check_branch
        %191 = sbr.rel (%p189) target = $region28
      $region27: #{self_attentive_span_extractor.1} parent=15 // pred_region
        %p192 = scmp.lt.s32.totalorder %s17, 1
        %s193 = scalar_select %p192, %s17, 1
        %s194 = scalar_lea.vmem %s2, %s193
      $region28: #{self_attentive_span_extractor.1} parent=15 // pred_fallthru
        _
      // Predicated region
      $region29: #{self_attentive_span_extractor.1} parent=15 // pred_check
        %p195 = pneg %p122
      $region30: #{self_attentive_span_extractor.1} parent=15 // pred_check_branch
        %197 = sbr.rel (%p195) target = $region32
      $region31: #{self_attentive_span_extractor.1} parent=15 // pred_region
        %p198 = scmp.lt.s32.totalorder %s17, 1
        %s199 = scalar_select %p198, %s17, 1
        %p200 = scmp.lt.s32.totalorder %s18, 0
        %s201 = scalar_select %p200, %s18, 0
        %s202 = smul.addr %s199, 16
        %s203 = sadd.s32 %s201, %s202
        %s204 = smul.addr %s203, 8
        %s205 = scalar_lea.vmem %s3, %s204
      $region32: #{self_attentive_span_extractor.1} parent=15 // pred_fallthru
        _
    $region16: #{self_attentive_span_extractor.1} parent=5 // pred_fallthru
      _
    %p206 = scmp.le.s32.totalorder 1, %s10
    %p207 = scmp.lt.s32.totalorder %s10, 3
    %p208 = pnand %p206, %p207
    %p209 = pneg %p208
    // Predicated region
    $region33: #{self_attentive_span_extractor.1} parent=5 // pred_check
      _
    $region34: #{self_attentive_span_extractor.1} parent=5 // pred_check_branch
      %211 = sbr.rel (%p208) target = $region36
    $region35: #{self_attentive_span_extractor.1} parent=5 // pred_region
      %s212 = ssub.s32 %s10, 1
      %p213 = scmp.lt.s32.totalorder %s19, 1
      %s214 = scalar_select %p213, %s19, 1
      %s215 = smul.addr %s214, 8
      %s216 = scalar_lea.vmem %s0, %s215
      %p217 = pneg %p48
      %p218 = pneg %p45
      %p219 = scmp.lt.s32.totalorder %s19, 1
      %s220 = scalar_select %p219, %s19, 1
      %s221 = smul.addr %s220, 8
      %s222 = scalar_lea.vmem %s1, %s221
      %p223 = pneg %p74
      %p224 = pneg %p71
      %p225 = scmp.lt.s32.totalorder %s19, 1
      %s226 = scalar_select %p225, %s19, 1
      %s227 = scalar_lea.vmem %s2, %s226
      %p228 = pneg %p100
      %p229 = pneg %p97
      %p230 = scmp.lt.s32.totalorder %s19, 1
      %s231 = scalar_select %p230, %s19, 1
      %p232 = scmp.lt.s32.totalorder %s20, 0
      %s233 = scalar_select %p232, %s20, 0
      %s234 = smul.addr %s231, 16
      %s235 = sadd.s32 %s233, %s234
      %s236 = smul.addr %s235, 8
      %s237 = scalar_lea.vmem %s3, %s236
      %p238 = pneg %p128
      %p239 = pneg %p125
      %p240 = pneg %p156
      %p241 = pneg %p153
      %p242 = scmp.lt.s32.totalorder %s19, 1
      %s243 = scalar_select %p242, %s19, 1
      %p244 = scmp.lt.s32.totalorder %s20, 0
      %s245 = scalar_select %p244, %s20, 0
      %s246 = sadd.s32 %s245, %s243
      %s247 = smul.addr %s246, 8
      %s248 = scalar_lea.vmem %s4, %s247
      %p249 = scmp.lt.s32.totalorder %s19, 1
      %s250 = scalar_select %p249, %s19, 1
      %s251 = smul.addr %s250, 8
      %s252 = scalar_lea.vmem %s0, %s251
      %p253 = scmp.lt.s32.totalorder %s19, 1
      %s254 = scalar_select %p253, %s19, 1
      %s255 = smul.addr %s254, 8
      %s256 = scalar_lea.vmem %s1, %s255
      %p257 = scmp.lt.s32.totalorder %s19, 1
      %s258 = scalar_select %p257, %s19, 1
      %s259 = scalar_lea.vmem %s2, %s258
      %p260 = scmp.lt.s32.totalorder %s19, 1
      %s261 = scalar_select %p260, %s19, 1
      %p262 = scmp.lt.s32.totalorder %s20, 0
      %s263 = scalar_select %p262, %s20, 0
      %s264 = smul.addr %s261, 16
      %s265 = sadd.s32 %s263, %s264
      %s266 = smul.addr %s265, 8
      %s267 = scalar_lea.vmem %s3, %s266
      %p268 = scmp.lt.s32.totalorder %s19, 1
      %s269 = scalar_select %p268, %s19, 1
      %p270 = scmp.lt.s32.totalorder %s20, 0
      %s271 = scalar_select %p270, %s20, 0
      %s272 = sadd.s32 %s271, %s269
      %s273 = smul.addr %s272, 8
      %s274 = scalar_lea.vmem %s4, %s273
      %p275 = scmp.eq.s32.totalorder %s20, 0
      // Predicated region
      $region37: #{self_attentive_span_extractor.1} parent=35 // pred_check
        %p276 = pneg %p275
      $region38: #{self_attentive_span_extractor.1} parent=35 // pred_check_branch
        %278 = sbr.rel (%p276) target = $region40
      $region39: #{self_attentive_span_extractor.1} parent=35 // pred_region
        %v279 = vld [vmem:[%s252] sm:$0xff]
        %v280 = vld [vmem:[%s256] sm:$0xff]
        %v281 = vld [vmem:[%s259] sm:$0x1]
        %v282 = vlaneseq
        %v283 = vand.u32 %v282, 127
        %284 = vset.pattern.permute.xlu0 0
        %285 = vperm.xlu0 %284, %v279
        %v286 = vpop.permute.xlu0 %285
        %vm287 = vcmp.ge.s32.totalorder %v283, %v286
        %288 = vset.pattern.permute.xlu0 0
        %289 = vperm.xlu0 %288, %v280
        %v290 = vpop.permute.xlu0 %289
        %vm291 = vcmp.le.s32.totalorder %v283, %v290
        %vm292 = vmand %vm287, %vm291
        %v293 = vsel %vm292, 1, 0
        %v294 = vcvt.s32.f32 %v293
        %v296 = vlaneseq
        %v297 = vshrl.u32 %v296, 7
        %v298 = vsub.s32 0, %v297
        %v299 = vrot.slane %v281, %v298
        %v301 = vmul.f32 %v299, %v294
        %302 = vmax.xlane.f32.xlu0 %v301
        %v303 = vpop.xlane.xlu0 %302
        %v304 = vsub.f32 %v301, %v303
        %v305 = vmul.f32 %v304, 1.442695
        %v306 = vpow.pop %v305
        %v307 = vmul.f32 %v306, %v294
        %308 = vadd.xlane.f32.xlu0 %v307
        %v309 = vpop.xlane.xlu0 %308
        %v310 = vadd.f32 %v309, 1e-13
        %v311 = vrcp.pop %v310
        %v312 = vmul.f32 %v310, %v311
        %v313 = vsub.f32 2.0, %v312
        %v314 = vmul.f32 %v311, %v313
        %v315 = vmul.f32 %v307, %v314
        %316 = vst [vmem:[#allocation2] sm:$0xff] %v315
      $region40: #{self_attentive_span_extractor.1} parent=35 // pred_fallthru
        _
      %v317 = vld [vmem:[#allocation2] sm:$0xff]
      %v318 = vld [vmem:[%s267] sm:$0xff]
      %v319 = vld [vmem:[%s267 + $0x8] sm:$0xff]
      %v320 = vld [vmem:[%s267 + $0x10] sm:$0xff]
      %v321 = vld [vmem:[%s267 + $0x18] sm:$0xff]
      %v322 = vld [vmem:[%s267 + $0x20] sm:$0xff]
      %v323 = vld [vmem:[%s267 + $0x28] sm:$0xff]
      %v324 = vld [vmem:[%s267 + $0x30] sm:$0xff]
      %v325 = vld [vmem:[%s267 + $0x38] sm:$0xff]
      %v326 = vld [vmem:[%s267 + $0x40] sm:$0xff]
      %v327 = vld [vmem:[%s267 + $0x48] sm:$0xff]
      %v328 = vld [vmem:[%s267 + $0x50] sm:$0xff]
      %v329 = vld [vmem:[%s267 + $0x58] sm:$0xff]
      %v330 = vld [vmem:[%s267 + $0x60] sm:$0xff]
      %v331 = vld [vmem:[%s267 + $0x68] sm:$0xff]
      %v332 = vld [vmem:[%s267 + $0x70] sm:$0xff]
      %v333 = vld [vmem:[%s267 + $0x78] sm:$0xff]
      %334 = vmatprep.subr.mxu0 0.0
      %335 = vmatpush1.msra.mxu0 %v333
      %336 = vmatprep.subr.mxu0 0.0
      %337 = vmatpush1.msra.mxu0 %v332
      %338 = vmatprep.subr.mxu0 0.0
      %339 = vmatpush1.msra.mxu0 %v331
      %340 = vmatprep.subr.mxu0 0.0
      %341 = vmatpush1.msra.mxu0 %v330
      %342 = vmatprep.subr.mxu0 0.0
      %343 = vmatpush1.msra.mxu0 %v329
      %344 = vmatprep.subr.mxu0 0.0
      %345 = vmatpush1.msra.mxu0 %v328
      %346 = vmatprep.subr.mxu0 0.0
      %347 = vmatpush1.msra.mxu0 %v327
      %348 = vmatprep.subr.mxu0 0.0
      %349 = vmatpush1.msra.mxu0 %v326
      %350 = vmatprep.subr.mxu0 0.0
      %351 = vmatpush1.msra.mxu0 %v325
      %352 = vmatprep.subr.mxu0 0.0
      %353 = vmatpush1.msra.mxu0 %v324
      %354 = vmatprep.subr.mxu0 0.0
      %355 = vmatpush1.msra.mxu0 %v323
      %356 = vmatprep.subr.mxu0 0.0
      %357 = vmatpush1.msra.mxu0 %v322
      %358 = vmatprep.subr.mxu0 0.0
      %359 = vmatpush1.msra.mxu0 %v321
      %360 = vmatprep.subr.mxu0 0.0
      %361 = vmatpush1.msra.mxu0 %v320
      %362 = vmatprep.subr.mxu0 0.0
      %363 = vmatpush1.msra.mxu0 %v319
      %364 = vmatprep.subr.mxu0 0.0
      %365 = vmatpush1.msra.mxu0 %v318
      %366 = vmatprep.subr.mxu0 0.0
      %367 = vmatpush2.msra.mxu0 0.0
      %368 = vmatprep.subr.mxu0 0.0
      %369 = vmatpush2.msra.mxu0 0.0
      %370 = vmatprep.subr.mxu0 0.0
      %371 = vmatpush2.msra.mxu0 0.0
      %372 = vmatprep.subr.mxu0 0.0
      %373 = vmatpush2.msra.mxu0 0.0
      %374 = vmatprep.subr.mxu0 0.0
      %375 = vmatpush2.msra.mxu0 0.0
      %376 = vmatprep.subr.mxu0 0.0
      %377 = vmatpush2.msra.mxu0 0.0
      %378 = vmatprep.subr.mxu0 0.0
      %379 = vmatpush2.msra.mxu0 0.0
      %380 = vmatprep.subr.mxu0 0.0
      %381 = vmatpush2.msra.mxu0 0.0
      %382 = vmatprep.subr.mxu0 0.0
      %383 = vmatpush2.msra.mxu0 0.0
      %384 = vmatprep.subr.mxu0 0.0
      %385 = vmatpush2.msra.mxu0 0.0
      %386 = vmatprep.subr.mxu0 0.0
      %387 = vmatpush2.msra.mxu0 0.0
      %388 = vmatprep.subr.mxu0 0.0
      %389 = vmatpush2.msra.mxu0 0.0
      %390 = vmatprep.subr.mxu0 0.0
      %391 = vmatpush2.msra.mxu0 0.0
      %392 = vmatprep.subr.mxu0 0.0
      %393 = vmatpush2.msra.mxu0 0.0
      %394 = vmatprep.subr.mxu0 0.0
      %395 = vmatpush2.msra.mxu0 0.0
      %396 = vmatprep.subr.mxu0 0.0
      %397 = vmatpush2.msra.mxu0 0.0
      %398 = vmatprep.mubr.f32.mxu0 0.0
      %399 = vmatmul.mubr.f32.gmra.mxu0 %v317
      %v400 = vpop.f32.mrf.mxu0
      %v401 = vadd.f32 0.0, %v400
      %v402 = vpop.f32.mrf.mxu0
      %403 = vdwg.mxu0
      %404 = vst [vmem:[%s274] sm:$0xff] %v401
      %p405 = scmp.lt.s32.totalorder %s19, 1
      %s406 = scalar_select %p405, %s19, 1
      %p407 = scmp.lt.s32.totalorder %s20, 0
      %s408 = scalar_select %p407, %s20, 0
      %s409 = sadd.s32 %s408, %s406
      %s410 = smul.addr %s409, 8
      %s411 = scalar_lea.vmem %s4, %s410
      // Predicated region
      $region41: #{self_attentive_span_extractor.1} parent=35 // pred_check
        %p412 = pneg %p153
      $region42: #{self_attentive_span_extractor.1} parent=35 // pred_check_branch
        %414 = sbr.rel (%p412) target = $region44
      $region43: #{self_attentive_span_extractor.1} parent=35 // pred_region
        _
      $region44: #{self_attentive_span_extractor.1} parent=35 // pred_fallthru
        _
    $region36: #{self_attentive_span_extractor.1} parent=5 // pred_fallthru
      _
    %p415 = scmp.le.s32.totalorder 2, %s10
    // Predicated region
    $region45: #{self_attentive_span_extractor.1} parent=5 // pred_check
      %p416 = pneg %p415
    $region46: #{self_attentive_span_extractor.1} parent=5 // pred_check_branch
      %418 = sbr.rel (%p416) target = $region48
    $region47: #{self_attentive_span_extractor.1} parent=5 // pred_region
      %s419 = ssub.s32 %s10, 2
      // Predicated region
      $region49: #{self_attentive_span_extractor.1} parent=47 // pred_check
        %p420 = pneg %p159
      $region50: #{self_attentive_span_extractor.1} parent=47 // pred_check_branch
        %422 = sbr.rel (%p420) target = $region52
      $region51: #{self_attentive_span_extractor.1} parent=47 // pred_region
        %p423 = scmp.lt.s32.totalorder %s21, 1
        %s424 = scalar_select %p423, %s21, 1
        %p425 = scmp.lt.s32.totalorder %s22, 0
        %s426 = scalar_select %p425, %s22, 0
        %s427 = sadd.s32 %s426, %s424
        %s428 = smul.addr %s427, 8
        %s429 = scalar_lea.vmem %s4, %s428
      $region52: #{self_attentive_span_extractor.1} parent=47 // pred_fallthru
        _
    $region48: #{self_attentive_span_extractor.1} parent=5 // pred_fallthru
      _
  $region6: #{self_attentive_span_extractor.1} parent=0 // loop_footer
    %s14 = sadd.s32 1, %s10
  $region7: #{self_attentive_span_extractor.1} parent=0 // loop_footer_branch
    %9 = sbr.rel target = $region3
  $region8: #{self_attentive_span_extractor.1} parent=0 // loop_exit
    _

</llo_original>
